<compile_context>
chip_gen: v7x
topology: tpu7x:2x2x1
jax: 0.10.0
libtpu: 0.0.40
codegen_flags: <defaults>
</compile_context>

<pallas_src>
import functools

import numpy as np
import jax
import jax.numpy as jnp
from jax.experimental import pallas as pl
from jax.experimental.pallas import tpu as pltpu

BN_EPS = 1e-5


# --------------------------------------------------------------------------
# Fused Pallas kernel: conv1+BN+ReLU -> (VMEM) -> conv2+BN + residual + ReLU
# --------------------------------------------------------------------------
def _residual_block_kernel(x_ref, xs_ref, w1_ref, w2_ref, wr_ref, b1_ref,
                           b2_ref, o_ref, y1_ref, *, h1, nb, row_off):
    """Fused ResidualBlock forward for `nb` images per grid step.

    x_ref : [nb, Hr, W*Cin]         H-zero-padded input rows (stride-regrouped),
                                    channels flattened into lanes.
    xs_ref: [nb, h1, W1*Cin]        H/W-strided input rows (residual branch).
    w1_ref: [3, W*Cin,  W1*Cout]    banded conv1+BN weights (kw, W-pad, W-stride
                                    folded in), one matrix per kh tap.
    w2_ref: [3, W1*Cout, W1*Cout]   banded conv2+BN weights (kw + W-pad folded).
    wr_ref: [W1*Cin, W1*Cout]       block-diagonal 1x1 residual+BN weights.
    b1_ref: [1, W1*Cout]            folded conv1 bias + BN1 bias (f32).
    b2_ref: [1, W1*Cout]            folded conv2+BN2 and residual+BNr bias (f32).
    o_ref : [nb, h1, W1*Cout]       lane-dense output.
    y1_ref: [nb, h1+2, W1*Cout]     VMEM scratch: conv1 output with zero H halo.
    """
    cy = y1_ref.shape[2]

    def merged_rows(ref, start):
        # Same h1-row window from every image of the block, merged into one
        # [nb*h1, lanes] LHS so each dot pushes nb*h1 rows into the MXU.
        parts = [ref[b, start:start + h1, :] for b in range(nb)]
        return parts[0] if nb == 1 else jnp.concatenate(parts, axis=0)

    # ---- Stage 1: conv1 (3x3, stride) + BN + ReLU -> VMEM scratch ----------
    acc = jnp.dot(merged_rows(x_ref, row_off[0]), w1_ref[0],
                  preferred_element_type=jnp.float32)
    acc += jnp.dot(merged_rows(x_ref, row_off[1]), w1_ref[1],
                   preferred_element_type=jnp.float32)
    acc += jnp.dot(merged_rows(x_ref, row_off[2]), w1_ref[2],
                   preferred_element_type=jnp.float32)
    y1 = jnp.maximum(acc + b1_ref[...], 0.0).astype(y1_ref.dtype)

    # Zero only the two H-halo rows (interior is written exactly once).
    # Unconditional (cheap: 2 rows) so it is correct even when the "parallel"
    # grid axis is split across TensorCores with per-core scratch.
    zero_row = jnp.zeros((nb, 1, cy), y1_ref.dtype)
    y1_ref[:, 0:1, :] = zero_row
    y1_ref[:, h1 + 1:h1 + 2, :] = zero_row
    y1_ref[:, 1:1 + h1, :] = y1.reshape(nb, h1, cy)

    # ---- Stage 2: conv2 (3x3, s=1) + BN + fused 1x1 residual + add + ReLU --
    acc = jnp.dot(merged_rows(xs_ref, 0), wr_ref[...],
                  preferred_element_type=jnp.float32)
    for kh in range(3):
        acc += jnp.dot(merged_rows(y1_ref, kh), w2_ref[kh],
                       preferred_element_type=jnp.float32)
    out = jnp.maximum(acc + b2_ref[...], 0.0)
    o_ref[...] = out.reshape(nb, h1, cy).astype(o_ref.dtype)


# --------------------------------------------------------------------------
# Wrapper-side helpers (tiny, run once in plain JAX)
# --------------------------------------------------------------------------
def fold_bn(conv_bias, gamma, beta, mean, var, eps=BN_EPS):
    scale = gamma / jnp.sqrt(var + eps)
    bias = (conv_bias - mean) * scale + beta
    return scale, bias


def _band_weights(wt, w_in_total, w_out, stride, pad):
    """wt: [3, 3, Cin, Cout] (kh, kw, ci, co) -> [3, w_in*Cin, w_out*Cout].

    band[kh, w_in*Cin + ci, j*Cout + co] = wt[kh, kw, ci, co] when
    w_in == j*stride + kw - pad (kw in 0..2, 0 <= w_in < w_in_total), else 0.
    Folds the kw taps, the W-padding and the W-stride into one lane-dense MXU
    contraction per kh tap.
    """
    c_in, c_out = wt.shape[2], wt.shape[3]
    kw = jnp.arange(3)[:, None, None]
    w_in = jnp.arange(w_in_total)[None, :, None]
    j = jnp.arange(w_out)[None, None, :]
    sel = (w_in == j * stride + kw - pad).astype(wt.dtype)   # [3, w_in, w_out]
    band = jnp.einsum("kwj,hkic->hwijc", sel, wt)
    return band.reshape(3, w_in_total * c_in, w_out * c_out)


def torch_w_to_khkwio(w_oihw):
    # [Cout, Cin, KH, KW] -> [KH, KW, Cin, Cout]
    return jnp.transpose(w_oihw, (2, 3, 1, 0))


# --------------------------------------------------------------------------
# ResidualBlock forward (single fused Pallas kernel)
# --------------------------------------------------------------------------
def residual_block_forward(x_nchw, p, stride, compute_dtype=jnp.bfloat16,
                           images_per_step=None):
    n, c_in, h, w = x_nchw.shape
    c_out = p["w1"].shape[0]
    h1 = (h + 2 - 3) // stride + 1
    w1 = (w + 2 - 3) // stride + 1

    nb = images_per_step
    if nb is None:
        # Fewer, fatter grid steps (amortise per-step overhead) while keeping
        # >= 2 steps so both v7x TensorCores get work.
        nb = 1 if n <= 2 else max(
            d for d in range(1, n + 1) if n % d == 0 and n // d >= 2)
    assert n % nb == 0, "batch must be divisible by images_per_step"

    # ---- fold inference BN + conv bias into weights / per-lane biases ------
    s1, b1 = fold_bn(p["b1_conv"], p["g1"], p["beta1"], p["m1"], p["v1"])
    s2, b2 = fold_bn(p["b2_conv"], p["g2"], p["beta2"], p["m2"], p["v2"])
    sr, br = fold_bn(p["br_conv"], p["gr"], p["betar"], p["mr"], p["vr"])

    wt1 = torch_w_to_khkwio(p["w1"]) * s1                  # [3,3,Cin,Cout]
    wt2 = torch_w_to_khkwio(p["w2"]) * s2                  # [3,3,Cout,Cout]
    wr = p["wr"][:, :, 0, 0].T * sr                        # [Cin,Cout]

    band1 = _band_weights(wt1, w, w1, stride, pad=1).astype(compute_dtype)
    band2 = _band_weights(wt2, w1, w1, 1, pad=1).astype(compute_dtype)
    wr_band = jnp.kron(jnp.eye(w1, dtype=jnp.float32), wr).astype(compute_dtype)

    bias1 = jnp.tile(b1, w1).reshape(1, w1 * c_out).astype(jnp.float32)
    bias2 = jnp.tile(b2 + br, w1).reshape(1, w1 * c_out).astype(jnp.float32)

    # ---- activations: NHWC, single cast, H-only zero pad, lane-flattened ---
    x = jnp.transpose(x_nchw, (0, 2, 3, 1)).astype(compute_dtype)   # NHWC
    xp = jnp.pad(x, ((0, 0), (1, 1), (0, 0), (0, 0)))               # H halo only
    xp = xp.reshape(n, h + 2, w * c_in)

    if stride == 1:
        x_arr = xp
        row_off = (0, 1, 2)
    else:
        # Regroup padded rows by (row mod stride) so every kh tap is a
        # contiguous, unstrided sublane window in-kernel.
        groups = [xp[:, r::stride, :] for r in range(stride)]
        starts = np.cumsum([0] + [g.shape[1] for g in groups[:-1]])
        x_arr = jnp.concatenate(groups, axis=1)
        row_off = tuple(int(starts[kh % stride]) + kh // stride
                        for kh in range(3))

    xs = x[:, ::stride, ::stride, :].reshape(n, h1, w1 * c_in)
    h_rows = x_arr.shape[1]

    out_flat = pl.pallas_call(
        functools.partial(_residual_block_kernel, h1=h1, nb=nb,
                          row_off=row_off),
        out_shape=jax.ShapeDtypeStruct((n, h1, w1 * c_out), compute_dtype),
        grid=(n // nb,),
        in_specs=[
            pl.BlockSpec((nb, h_rows, w * c_in), lambda i: (i, 0, 0)),
            pl.BlockSpec((nb, h1, w1 * c_in), lambda i: (i, 0, 0)),
            pl.BlockSpec((3, w * c_in, w1 * c_out), lambda i: (0, 0, 0)),
            pl.BlockSpec((3, w1 * c_out, w1 * c_out), lambda i: (0, 0, 0)),
            pl.BlockSpec((w1 * c_in, w1 * c_out), lambda i: (0, 0)),
            pl.BlockSpec((1, w1 * c_out), lambda i: (0, 0)),
            pl.BlockSpec((1, w1 * c_out), lambda i: (0, 0)),
        ],
        out_specs=pl.BlockSpec((nb, h1, w1 * c_out), lambda i: (i, 0, 0)),
        scratch_shapes=[pltpu.VMEM((nb, h1 + 2, w1 * c_out), compute_dtype)],
        compiler_params=pltpu.CompilerParams(
            dimension_semantics=("parallel",)),
    )(x_arr, xs, band1, band2, wr_band, bias1, bias2)

    out = out_flat.reshape(n, h1, w1, c_out)
    return jnp.transpose(out, (0, 3, 1, 2))                # NHWC -> NCHW


# --------------------------------------------------------------------------
# Pure-JAX reference (lax.conv) for correctness check
# --------------------------------------------------------------------------
def ref_forward(x, p, stride, eps=BN_EPS):
    def conv(xx, w, b, s, pad):
        y = jax.lax.conv_general_dilated(
            xx, w, (s, s), [(pad, pad), (pad, pad)],
            dimension_numbers=("NCHW", "OIHW", "NCHW"))
        return y + b[None, :, None, None]

    def bn(xx, g, bt, m, v):
        return ((xx - m[None, :, None, None])
                / jnp.sqrt(v[None, :, None, None] + eps)
                * g[None, :, None, None] + bt[None, :, None, None])

    r = bn(conv(x, p["wr"], p["br_conv"], stride, 0),
           p["gr"], p["betar"], p["mr"], p["vr"])
    y = jax.nn.relu(bn(conv(x, p["w1"], p["b1_conv"], stride, 1),
                       p["g1"], p["beta1"], p["m1"], p["v1"]))
    y = bn(conv(y, p["w2"], p["b2_conv"], 1, 1),
           p["g2"], p["beta2"], p["m2"], p["v2"])
    return jax.nn.relu(y + r)


# --------------------------------------------------------------------------
# Deterministic parameter init + run
# --------------------------------------------------------------------------
def make_params(key, in_c, out_c):
    ks = jax.random.split(key, 24)
    nrm = lambda k, shp, s=0.1: s * jax.random.normal(k, shp, jnp.float32)
    uni = lambda k, shp: jax.random.uniform(k, shp, jnp.float32, 0.5, 1.5)
    return dict(
        w1=nrm(ks[0], (out_c, in_c, 3, 3)), b1_conv=nrm(ks[1], (out_c,)),
        g1=uni(ks[2], (out_c,)), beta1=nrm(ks[3], (out_c,)),
        m1=nrm(ks[4], (out_c,)), v1=uni(ks[5], (out_c,)),
        w2=nrm(ks[6], (out_c, out_c, 3, 3)), b2_conv=nrm(ks[7], (out_c,)),
        g2=uni(ks[8], (out_c,)), beta2=nrm(ks[9], (out_c,)),
        m2=nrm(ks[10], (out_c,)), v2=uni(ks[11], (out_c,)),
        wr=nrm(ks[12], (out_c, in_c, 1, 1)), br_conv=nrm(ks[13], (out_c,)),
        gr=uni(ks[14], (out_c,)), betar=nrm(ks[15], (out_c,)),
        mr=nrm(ks[16], (out_c,)), vr=uni(ks[17], (out_c,)),
    )


if __name__ == "__main__":
    key = jax.random.PRNGKey(0)
    k_x, k_p = jax.random.split(key)

    in_c, out_c = 4, 8
    N, H, W = 2, 16, 16

    x = jax.random.normal(k_x, (N, in_c, H, W), jnp.float32)
    params = make_params(k_p, in_c, out_c)

    for stride in (1, 2):
        ref = jax.block_until_ready(ref_forward(x, params, stride))

        # f32 compute path (one image / grid step): tight check of fused logic.
        out_f32 = jax.block_until_ready(
            residual_block_forward(x, params, stride,
                                   compute_dtype=jnp.float32))
        np.testing.assert_allclose(np.asarray(out_f32), np.asarray(ref),
                                   rtol=2e-4, atol=2e-4)

        if stride == 1:
            # f32, both images in a single grid step (merged-rows batching).
            out_f32_b = jax.block_until_ready(
                residual_block_forward(x, params, stride,
                                       compute_dtype=jnp.float32,
                                       images_per_step=2))
            np.testing.assert_allclose(np.asarray(out_f32_b), np.asarray(ref),
                                       rtol=2e-4, atol=2e-4)

        # bf16 fast path (default): MXU-native operands, f32 accumulation,
        # bf16 output.  Loose tolerance accounts only for bf16 rounding; the
        # exact kernel logic is verified by the f32 runs above.
        out_bf16 = jax.block_until_ready(
            residual_block_forward(x, params, stride))
        np.testing.assert_allclose(
            np.asarray(out_bf16.astype(jnp.float32)), np.asarray(ref),
            rtol=1e-1, atol=1e-1)

        assert out_f32.shape == (N, out_c, H // stride, W // stride)
        assert out_bf16.shape == (N, out_c, H // stride, W // stride)

    print("KERNEL_OK")
</pallas_src>

<mosaic_0001>
module attributes {stable_mosaic.version = 11 : i64} {
  func.func @_residual_block_kernel(%arg0: i32, %arg1: memref<1x18x64xf32, #tpu.memory_space<vmem>>, %arg2: memref<1x16x64xf32, #tpu.memory_space<vmem>>, %arg3: memref<3x64x128xf32, #tpu.memory_space<vmem>>, %arg4: memref<3x128x128xf32, #tpu.memory_space<vmem>>, %arg5: memref<64x128xf32, #tpu.memory_space<vmem>>, %arg6: memref<1x128xf32, #tpu.memory_space<vmem>>, %arg7: memref<1x128xf32, #tpu.memory_space<vmem>>, %arg8: memref<1x16x128xf32, #tpu.memory_space<vmem>>, %arg9: memref<1x18x128xf32, #tpu.memory_space<vmem>>) attributes {dimension_semantics = [#tpu.dimension_semantics<parallel>], iteration_bounds = array<i64: 2>, scalar_prefetch = 0 : i64, scratch_operands = 1 : i64, tpu.core_type = #tpu.core_type<tc>, window_params = [{transform_indices = @transform_0, window_bounds = array<i64: 1, 18, 64>}, {transform_indices = @transform_1, window_bounds = array<i64: 1, 16, 64>}, {pipeline_mode = #tpu.pipeline_mode<synchronous>, transform_indices = @transform_2, window_bounds = array<i64: 3, 64, 128>}, {pipeline_mode = #tpu.pipeline_mode<synchronous>, transform_indices = @transform_3, window_bounds = array<i64: 3, 128, 128>}, {pipeline_mode = #tpu.pipeline_mode<synchronous>, transform_indices = @transform_4, window_bounds = array<i64: 64, 128>}, {pipeline_mode = #tpu.pipeline_mode<synchronous>, transform_indices = @transform_5, window_bounds = array<i64: 1, 128>}, {pipeline_mode = #tpu.pipeline_mode<synchronous>, transform_indices = @transform_6, window_bounds = array<i64: 1, 128>}, {transform_indices = @transform_7, window_bounds = array<i64: 1, 16, 128>}]} {
    %c0 = arith.constant 0 : index
    %c0_0 = arith.constant 0 : index
    %c0_1 = arith.constant 0 : index
    %0 = vector.load %arg1[%c0, %c0_0, %c0_1] : memref<1x18x64xf32, #tpu.memory_space<vmem>>, vector<1x16x64xf32>
    %1 = vector.shape_cast %0 : vector<1x16x64xf32> to vector<16x64xf32>
    %c0_2 = arith.constant 0 : index
    %c0_3 = arith.constant 0 : index
    %c0_4 = arith.constant 0 : index
    %2 = vector.load %arg3[%c0_2, %c0_3, %c0_4] : memref<3x64x128xf32, #tpu.memory_space<vmem>>, vector<1x64x128xf32>
    %3 = vector.shape_cast %2 : vector<1x64x128xf32> to vector<64x128xf32>
    %cst = arith.constant dense<0.000000e+00> : vector<16x128xf32>
    %4 = tpu.matmul %1, %3, %cst {dimension_numbers = #tpu.dot_dimension_numbers<[1], [0], [0], [1], [0, 0, 1, 1], [], []>} : vector<16x64xf32>, vector<64x128xf32>, vector<16x128xf32> -> vector<16x128xf32>
    %c0_5 = arith.constant 0 : index
    %c1 = arith.constant 1 : index
    %c0_6 = arith.constant 0 : index
    %5 = vector.load %arg1[%c0_5, %c1, %c0_6] : memref<1x18x64xf32, #tpu.memory_space<vmem>>, vector<1x16x64xf32>
    %6 = vector.shape_cast %5 : vector<1x16x64xf32> to vector<16x64xf32>
    %c1_7 = arith.constant 1 : index
    %c0_8 = arith.constant 0 : index
    %c0_9 = arith.constant 0 : index
    %7 = vector.load %arg3[%c1_7, %c0_8, %c0_9] : memref<3x64x128xf32, #tpu.memory_space<vmem>>, vector<1x64x128xf32>
    %8 = vector.shape_cast %7 : vector<1x64x128xf32> to vector<64x128xf32>
    %cst_10 = arith.constant dense<0.000000e+00> : vector<16x128xf32>
    %9 = tpu.matmul %6, %8, %cst_10 {dimension_numbers = #tpu.dot_dimension_numbers<[1], [0], [0], [1], [0, 0, 1, 1], [], []>} : vector<16x64xf32>, vector<64x128xf32>, vector<16x128xf32> -> vector<16x128xf32>
    %10 = arith.addf %4, %9 : vector<16x128xf32>
    %c0_11 = arith.constant 0 : index
    %c2 = arith.constant 2 : index
    %c0_12 = arith.constant 0 : index
    %11 = vector.load %arg1[%c0_11, %c2, %c0_12] : memref<1x18x64xf32, #tpu.memory_space<vmem>>, vector<1x16x64xf32>
    %12 = vector.shape_cast %11 : vector<1x16x64xf32> to vector<16x64xf32>
    %c2_13 = arith.constant 2 : index
    %c0_14 = arith.constant 0 : index
    %c0_15 = arith.constant 0 : index
    %13 = vector.load %arg3[%c2_13, %c0_14, %c0_15] : memref<3x64x128xf32, #tpu.memory_space<vmem>>, vector<1x64x128xf32>
    %14 = vector.shape_cast %13 : vector<1x64x128xf32> to vector<64x128xf32>
    %cst_16 = arith.constant dense<0.000000e+00> : vector<16x128xf32>
    %15 = tpu.matmul %12, %14, %cst_16 {dimension_numbers = #tpu.dot_dimension_numbers<[1], [0], [0], [1], [0, 0, 1, 1], [], []>} : vector<16x64xf32>, vector<64x128xf32>, vector<16x128xf32> -> vector<16x128xf32>
    %16 = arith.addf %10, %15 : vector<16x128xf32>
    %c0_17 = arith.constant 0 : index
    %c0_18 = arith.constant 0 : index
    %17 = vector.load %arg6[%c0_17, %c0_18] : memref<1x128xf32, #tpu.memory_space<vmem>>, vector<1x128xf32>
    %18 = vector.broadcast %17 : vector<1x128xf32> to vector<16x128xf32>
    %19 = arith.addf %16, %18 : vector<16x128xf32>
    %cst_19 = arith.constant 0.000000e+00 : f32
    %20 = vector.broadcast %cst_19 : f32 to vector<16x128xf32>
    %21 = arith.maximumf %19, %20 : vector<16x128xf32>
    %cst_20 = arith.constant 0.000000e+00 : f32
    %22 = vector.broadcast %cst_20 : f32 to vector<1x1x128xf32>
    %c0_21 = arith.constant 0 : index
    %c0_22 = arith.constant 0 : index
    %c0_23 = arith.constant 0 : index
    %23 = vector.load %arg9[%c0_21, %c0_22, %c0_23] : memref<1x18x128xf32, #tpu.memory_space<vmem>>, vector<1x1x128xf32>
    tpu.vector_store %arg9[%c0_21, %c0_22, %c0_23], %22 {strides = array<i32>} : memref<1x18x128xf32, #tpu.memory_space<vmem>>, vector<1x1x128xf32>,
    %c0_24 = arith.constant 0 : index
    %c17 = arith.constant 17 : index
    %c0_25 = arith.constant 0 : index
    %24 = vector.load %arg9[%c0_24, %c17, %c0_25] : memref<1x18x128xf32, #tpu.memory_space<vmem>>, vector<1x1x128xf32>
    tpu.vector_store %arg9[%c0_24, %c17, %c0_25], %22 {strides = array<i32>} : memref<1x18x128xf32, #tpu.memory_space<vmem>>, vector<1x1x128xf32>,
    %25 = vector.shape_cast %21 : vector<16x128xf32> to vector<1x16x128xf32>
    %c0_26 = arith.constant 0 : index
    %c1_27 = arith.constant 1 : index
    %c0_28 = arith.constant 0 : index
    %26 = vector.load %arg9[%c0_26, %c1_27, %c0_28] : memref<1x18x128xf32, #tpu.memory_space<vmem>>, vector<1x16x128xf32>
    tpu.vector_store %arg9[%c0_26, %c1_27, %c0_28], %25 {strides = array<i32>} : memref<1x18x128xf32, #tpu.memory_space<vmem>>, vector<1x16x128xf32>,
    %c0_29 = arith.constant 0 : index
    %c0_30 = arith.constant 0 : index
    %c0_31 = arith.constant 0 : index
    %27 = vector.load %arg2[%c0_29, %c0_30, %c0_31] : memref<1x16x64xf32, #tpu.memory_space<vmem>>, vector<1x16x64xf32>
    %28 = vector.shape_cast %27 : vector<1x16x64xf32> to vector<16x64xf32>
    %c0_32 = arith.constant 0 : index
    %c0_33 = arith.constant 0 : index
    %29 = vector.load %arg5[%c0_32, %c0_33] : memref<64x128xf32, #tpu.memory_space<vmem>>, vector<64x128xf32>
    %cst_34 = arith.constant dense<0.000000e+00> : vector<16x128xf32>
    %30 = tpu.matmul %28, %29, %cst_34 {dimension_numbers = #tpu.dot_dimension_numbers<[1], [0], [0], [1], [0, 0, 1, 1], [], []>} : vector<16x64xf32>, vector<64x128xf32>, vector<16x128xf32> -> vector<16x128xf32>
    %c0_35 = arith.constant 0 : index
    %c0_36 = arith.constant 0 : index
    %c0_37 = arith.constant 0 : index
    %31 = vector.load %arg9[%c0_35, %c0_36, %c0_37] : memref<1x18x128xf32, #tpu.memory_space<vmem>>, vector<1x16x128xf32>
    %32 = vector.shape_cast %31 : vector<1x16x128xf32> to vector<16x128xf32>
    %c0_38 = arith.constant 0 : index
    %c0_39 = arith.constant 0 : index
    %c0_40 = arith.constant 0 : index
    %33 = vector.load %arg4[%c0_38, %c0_39, %c0_40] : memref<3x128x128xf32, #tpu.memory_space<vmem>>, vector<1x128x128xf32>
    %34 = vector.shape_cast %33 : vector<1x128x128xf32> to vector<128x128xf32>
    %cst_41 = arith.constant dense<0.000000e+00> : vector<16x128xf32>
    %35 = tpu.matmul %32, %34, %cst_41 {dimension_numbers = #tpu.dot_dimension_numbers<[1], [0], [0], [1], [0, 0, 1, 1], [], []>} : vector<16x128xf32>, vector<128x128xf32>, vector<16x128xf32> -> vector<16x128xf32>
    %36 = arith.addf %30, %35 : vector<16x128xf32>
    %c0_42 = arith.constant 0 : index
    %c1_43 = arith.constant 1 : index
    %c0_44 = arith.constant 0 : index
    %37 = vector.load %arg9[%c0_42, %c1_43, %c0_44] : memref<1x18x128xf32, #tpu.memory_space<vmem>>, vector<1x16x128xf32>
    %38 = vector.shape_cast %37 : vector<1x16x128xf32> to vector<16x128xf32>
    %c1_45 = arith.constant 1 : index
    %c0_46 = arith.constant 0 : index
    %c0_47 = arith.constant 0 : index
    %39 = vector.load %arg4[%c1_45, %c0_46, %c0_47] : memref<3x128x128xf32, #tpu.memory_space<vmem>>, vector<1x128x128xf32>
    %40 = vector.shape_cast %39 : vector<1x128x128xf32> to vector<128x128xf32>
    %cst_48 = arith.constant dense<0.000000e+00> : vector<16x128xf32>
    %41 = tpu.matmul %38, %40, %cst_48 {dimension_numbers = #tpu.dot_dimension_numbers<[1], [0], [0], [1], [0, 0, 1, 1], [], []>} : vector<16x128xf32>, vector<128x128xf32>, vector<16x128xf32> -> vector<16x128xf32>
    %42 = arith.addf %36, %41 : vector<16x128xf32>
    %c0_49 = arith.constant 0 : index
    %c2_50 = arith.constant 2 : index
    %c0_51 = arith.constant 0 : index
    %43 = vector.load %arg9[%c0_49, %c2_50, %c0_51] : memref<1x18x128xf32, #tpu.memory_space<vmem>>, vector<1x16x128xf32>
    %44 = vector.shape_cast %43 : vector<1x16x128xf32> to vector<16x128xf32>
    %c2_52 = arith.constant 2 : index
    %c0_53 = arith.constant 0 : index
    %c0_54 = arith.constant 0 : index
    %45 = vector.load %arg4[%c2_52, %c0_53, %c0_54] : memref<3x128x128xf32, #tpu.memory_space<vmem>>, vector<1x128x128xf32>
    %46 = vector.shape_cast %45 : vector<1x128x128xf32> to vector<128x128xf32>
    %cst_55 = arith.constant dense<0.000000e+00> : vector<16x128xf32>
    %47 = tpu.matmul %44, %46, %cst_55 {dimension_numbers = #tpu.dot_dimension_numbers<[1], [0], [0], [1], [0, 0, 1, 1], [], []>} : vector<16x128xf32>, vector<128x128xf32>, vector<16x128xf32> -> vector<16x128xf32>
    %48 = arith.addf %42, %47 : vector<16x128xf32>
    %c0_56 = arith.constant 0 : index
    %c0_57 = arith.constant 0 : index
    %49 = vector.load %arg7[%c0_56, %c0_57] : memref<1x128xf32, #tpu.memory_space<vmem>>, vector<1x128xf32>
    %50 = vector.broadcast %49 : vector<1x128xf32> to vector<16x128xf32>
    %51 = arith.addf %48, %50 : vector<16x128xf32>
    %cst_58 = arith.constant 0.000000e+00 : f32
    %52 = vector.broadcast %cst_58 : f32 to vector<16x128xf32>
    %53 = arith.maximumf %51, %52 : vector<16x128xf32>
    %54 = vector.shape_cast %53 : vector<16x128xf32> to vector<1x16x128xf32>
    %c0_59 = arith.constant 0 : index
    %c0_60 = arith.constant 0 : index
    %c0_61 = arith.constant 0 : index
    %55 = vector.load %arg8[%c0_59, %c0_60, %c0_61] : memref<1x16x128xf32, #tpu.memory_space<vmem>>, vector<1x16x128xf32>
    tpu.vector_store %arg8[%c0_59, %c0_60, %c0_61], %54 {strides = array<i32>} : memref<1x16x128xf32, #tpu.memory_space<vmem>>, vector<1x16x128xf32>,
    return
  }
  func.func @transform_0(%arg0: i32) -> (i32, i32, i32) {
    %c0_i32 = arith.constant 0 : i32
    %c0_i32_0 = arith.constant 0 : i32
    %c0_i32_1 = arith.constant 0 : i32
    return %arg0, %c0_i32, %c0_i32_0 : i32, i32, i32
  }
  func.func @transform_1(%arg0: i32) -> (i32, i32, i32) {
    %c0_i32 = arith.constant 0 : i32
    %c0_i32_0 = arith.constant 0 : i32
    %c0_i32_1 = arith.constant 0 : i32
    return %arg0, %c0_i32, %c0_i32_0 : i32, i32, i32
  }
  func.func @transform_2(%arg0: i32) -> (i32, i32, i32) {
    %c0_i32 = arith.constant 0 : i32
    %c0_i32_0 = arith.constant 0 : i32
    %c0_i32_1 = arith.constant 0 : i32
    %c0_i32_2 = arith.constant 0 : i32
    return %c0_i32, %c0_i32_0, %c0_i32_1 : i32, i32, i32
  }
  func.func @transform_3(%arg0: i32) -> (i32, i32, i32) {
    %c0_i32 = arith.constant 0 : i32
    %c0_i32_0 = arith.constant 0 : i32
    %c0_i32_1 = arith.constant 0 : i32
    %c0_i32_2 = arith.constant 0 : i32
    return %c0_i32, %c0_i32_0, %c0_i32_1 : i32, i32, i32
  }
  func.func @transform_4(%arg0: i32) -> (i32, i32) {
    %c0_i32 = arith.constant 0 : i32
    %c0_i32_0 = arith.constant 0 : i32
    %c0_i32_1 = arith.constant 0 : i32
    return %c0_i32, %c0_i32_0 : i32, i32
  }
  func.func @transform_5(%arg0: i32) -> (i32, i32) {
    %c0_i32 = arith.constant 0 : i32
    %c0_i32_0 = arith.constant 0 : i32
    %c0_i32_1 = arith.constant 0 : i32
    return %c0_i32, %c0_i32_0 : i32, i32
  }
  func.func @transform_6(%arg0: i32) -> (i32, i32) {
    %c0_i32 = arith.constant 0 : i32
    %c0_i32_0 = arith.constant 0 : i32
    %c0_i32_1 = arith.constant 0 : i32
    return %c0_i32, %c0_i32_0 : i32, i32
  }
  func.func @transform_7(%arg0: i32) -> (i32, i32, i32) {
    %c0_i32 = arith.constant 0 : i32
    %c0_i32_0 = arith.constant 0 : i32
    %c0_i32_1 = arith.constant 0 : i32
    return %arg0, %c0_i32, %c0_i32_0 : i32, i32, i32
  }
}

</mosaic_0001>

<llo_original>
// kernel: tpu_custom_call.1
$region0: #{tpu_custom_call.1}
  #allocation0 [shape = 'u32[]', space=smem, size = 0x4, offset = 0x4, fixed_abs, tag = 'smem constant byte address 0x4 - core index']
  #allocation1 [shape = 'u32[144,128]{1,0:T(1,128)}', space=vmem, size = 0x12000, scoped, tag = 'internal scratch']
  #allocation2 [shape = 'f32[1,18,128]{2,1,0:T(8,128)}', space=vmem, size = 0x3000, scoped, tag = 'scratch operand']
  %s0 = inlined_call_operand.vmem [shape: f32[2,18,64], index: 0, kind: input, shape index: {}]
  %s1 = inlined_call_operand.vmem [shape: f32[2,16,64], index: 1, kind: input, shape index: {}]
  %s2 = inlined_call_operand.hbm [shape: f32[3,64,128], index: 2, kind: input, shape index: {}]
  %s3 = inlined_call_operand.hbm [shape: f32[3,128,128], index: 3, kind: input, shape index: {}]
  %s4 = inlined_call_operand.vmem [shape: f32[64,128], index: 4, kind: input, shape index: {}]
  %s5 = inlined_call_operand.vmem [shape: f32[1,128], index: 5, kind: input, shape index: {}]
  %s6 = inlined_call_operand.vmem [shape: f32[1,128], index: 6, kind: input, shape index: {}]
  %s7 = inlined_call_operand.hbm [shape: f32[2,16,128], index: 7, kind: output, shape index: {}]
  %s8 = sld [smem:[#allocation0]]
  $region69: #{tpu_custom_call.1} parent=0
    _
  %s10 = ssub.s32 1, %s8
  %s11 = scalar_select 0, %s10, %s8
  $region1: #{tpu_custom_call.1} parent=0
    #allocation3 [shape = 'u8[98304]{0}', space=vmem, size = 0x18000, scoped, tag = 'input window, operand 2, single buffered']
    #allocation4 [shape = 's32[2]{0}', space=sflag, size = 0x8, scoped, tag = 'scoped memory for tpu_custom_call.1']
    #allocation5 [shape = 's32[2]{0}', space=sflag, size = 0x8, scoped, tag = 'scoped memory for tpu_custom_call.1']
    #allocation6 [shape = 'u8[196608]{0}', space=vmem, size = 0x30000, scoped, tag = 'input window, operand 3, single buffered']
    #allocation7 [shape = 's32[1]{0}', space=sflag, size = 0x4, scoped, tag = 'scoped memory for tpu_custom_call.1']
    #allocation8 [shape = 'u8[16384]{0}', space=vmem, size = 0x4000, scoped, tag = 'output window, operand 0']
    %12 = vsyncpa [#allocation4], 0
    %13 = vsyncpa [#allocation7], 0
    %14 = vsyncpa [#allocation5], 0
    %s15 = scalar_lea.sflag [#allocation5], 1
    %16 = vsyncpa %s15, 0
    loop: start=0, step=1, limit=4
    $region2: #{tpu_custom_call.1} parent=1 // loop_pre_header
      _
    $region3: #{tpu_custom_call.1} parent=1 // loop_header
      %s18 = sphi 0, %s22
      %p19 = scmp.ge.s32.totalorder %s18, 4
      %s28 = sphi 0, %s30
      %s31 = sphi 0, %s28
      %s32 = sphi 0, %s31
      %s48 = sphi 0, %s32
      %s54 = sphi 0, %s56
      %s57 = sphi 0, %s54
      %s58 = sphi 0, %s57
      %s74 = sphi 0, %s58
      %s78 = sphi 0, %s78
      %s80 = sphi 0, %s78
      %s81 = sphi 0, %s80
      %s95 = sphi 0, %s81
      %s99 = sphi 0, %s99
      %s101 = sphi 0, %s99
      %s102 = sphi 0, %s101
      %s116 = sphi 0, %s102
      %s120 = sphi 0, %s120
      %s122 = sphi 0, %s120
      %s123 = sphi 0, %s122
      %s137 = sphi 0, %s123
      %s141 = sphi 0, %s141
      %s143 = sphi 0, %s141
      %s144 = sphi 0, %s143
      %s158 = sphi 0, %s144
      %s162 = sphi 0, %s162
      %s164 = sphi 0, %s162
      %s165 = sphi 0, %s164
      %s179 = sphi 0, %s165
      %s185 = sphi 0, %s187
      %s188 = sphi 0, %s185
      %s189 = sphi 0, %s188
      %s205 = sphi 0, %s189
    $region4: #{tpu_custom_call.1} parent=1 // loop_header_branch
      %21 = sbr.rel (%p19) target = $region8
    $region5: #{tpu_custom_call.1} parent=1 // loop_body
      %s23 = ssub.s32 %s18, 1
      %s24 = ssub.s32 %s18, 2
      %s25 = sadd.s32 %s18, 1
      %s26 = ssub.s32 %s18, %s25
      %p27 = scmp.eq.s32.totalorder %s26, 0
      %s29 = sadd.s32 %s28, 1
      %s30 = scalar_select %p27, %s28, %s29
      %p33 = pneg %p27
      %p34 = scmp.eq.s32.totalorder %s18, 1
      %p35 = por %p33, %p34
      %p36 = scmp.ne.s32.totalorder %s28, %s31
      %p37 = scmp.eq.s32.totalorder %s18, 0
      %p38 = por %p36, %p37
      %p39 = scmp.ne.s32.totalorder %s28, %s31
      %p40 = scmp.eq.s32.totalorder %s23, 1
      %p41 = por %p39, %p40
      %p42 = scmp.ne.s32.totalorder %s31, %s32
      %p43 = scmp.eq.s32.totalorder %s23, 0
      %p44 = por %p42, %p43
      %p45 = scmp.ne.s32.totalorder %s31, %s32
      %p46 = scmp.eq.s32.totalorder %s24, 1
      %p47 = por %p45, %p46
      %p49 = scmp.ne.s32.totalorder %s32, %s48
      %p50 = scmp.eq.s32.totalorder %s24, 0
      %p51 = por %p49, %p50
      %s52 = ssub.s32 %s18, %s25
      %p53 = scmp.eq.s32.totalorder %s52, 0
      %s55 = sadd.s32 %s54, 1
      %s56 = scalar_select %p53, %s54, %s55
      %p59 = pneg %p53
      %p60 = scmp.eq.s32.totalorder %s18, 1
      %p61 = por %p59, %p60
      %p62 = scmp.ne.s32.totalorder %s54, %s57
      %p63 = scmp.eq.s32.totalorder %s18, 0
      %p64 = por %p62, %p63
      %p65 = scmp.ne.s32.totalorder %s54, %s57
      %p66 = scmp.eq.s32.totalorder %s23, 1
      %p67 = por %p65, %p66
      %p68 = scmp.ne.s32.totalorder %s57, %s58
      %p69 = scmp.eq.s32.totalorder %s23, 0
      %p70 = por %p68, %p69
      %p71 = scmp.ne.s32.totalorder %s57, %s58
      %p72 = scmp.eq.s32.totalorder %s24, 1
      %p73 = por %p71, %p72
      %p75 = scmp.ne.s32.totalorder %s58, %s74
      %p76 = scmp.eq.s32.totalorder %s24, 0
      %p77 = por %p75, %p76
      %s79 = sadd.s32 %s78, 1
      %p82 = scmp.eq.s32.totalorder %s18, 1
      %p83 = scmp.ne.s32.totalorder %s78, %s80
      %p84 = scmp.eq.s32.totalorder %s18, 0
      %p85 = por %p83, %p84
      %p86 = scmp.ne.s32.totalorder %s78, %s80
      %p87 = scmp.eq.s32.totalorder %s23, 1
      %p88 = por %p86, %p87
      %p89 = scmp.ne.s32.totalorder %s80, %s81
      %p90 = scmp.eq.s32.totalorder %s23, 0
      %p91 = por %p89, %p90
      %p92 = scmp.ne.s32.totalorder %s80, %s81
      %p93 = scmp.eq.s32.totalorder %s24, 1
      %p94 = por %p92, %p93
      %p96 = scmp.ne.s32.totalorder %s81, %s95
      %p97 = scmp.eq.s32.totalorder %s24, 0
      %p98 = por %p96, %p97
      %s100 = sadd.s32 %s99, 1
      %p103 = scmp.eq.s32.totalorder %s18, 1
      %p104 = scmp.ne.s32.totalorder %s99, %s101
      %p105 = scmp.eq.s32.totalorder %s18, 0
      %p106 = por %p104, %p105
      %p107 = scmp.ne.s32.totalorder %s99, %s101
      %p108 = scmp.eq.s32.totalorder %s23, 1
      %p109 = por %p107, %p108
      %p110 = scmp.ne.s32.totalorder %s101, %s102
      %p111 = scmp.eq.s32.totalorder %s23, 0
      %p112 = por %p110, %p111
      %p113 = scmp.ne.s32.totalorder %s101, %s102
      %p114 = scmp.eq.s32.totalorder %s24, 1
      %p115 = por %p113, %p114
      %p117 = scmp.ne.s32.totalorder %s102, %s116
      %p118 = scmp.eq.s32.totalorder %s24, 0
      %p119 = por %p117, %p118
      %s121 = sadd.s32 %s120, 1
      %p124 = scmp.eq.s32.totalorder %s18, 1
      %p125 = scmp.ne.s32.totalorder %s120, %s122
      %p126 = scmp.eq.s32.totalorder %s18, 0
      %p127 = por %p125, %p126
      %p128 = scmp.ne.s32.totalorder %s120, %s122
      %p129 = scmp.eq.s32.totalorder %s23, 1
      %p130 = por %p128, %p129
      %p131 = scmp.ne.s32.totalorder %s122, %s123
      %p132 = scmp.eq.s32.totalorder %s23, 0
      %p133 = por %p131, %p132
      %p134 = scmp.ne.s32.totalorder %s122, %s123
      %p135 = scmp.eq.s32.totalorder %s24, 1
      %p136 = por %p134, %p135
      %p138 = scmp.ne.s32.totalorder %s123, %s137
      %p139 = scmp.eq.s32.totalorder %s24, 0
      %p140 = por %p138, %p139
      %s142 = sadd.s32 %s141, 1
      %p145 = scmp.eq.s32.totalorder %s18, 1
      %p146 = scmp.ne.s32.totalorder %s141, %s143
      %p147 = scmp.eq.s32.totalorder %s18, 0
      %p148 = por %p146, %p147
      %p149 = scmp.ne.s32.totalorder %s141, %s143
      %p150 = scmp.eq.s32.totalorder %s23, 1
      %p151 = por %p149, %p150
      %p152 = scmp.ne.s32.totalorder %s143, %s144
      %p153 = scmp.eq.s32.totalorder %s23, 0
      %p154 = por %p152, %p153
      %p155 = scmp.ne.s32.totalorder %s143, %s144
      %p156 = scmp.eq.s32.totalorder %s24, 1
      %p157 = por %p155, %p156
      %p159 = scmp.ne.s32.totalorder %s144, %s158
      %p160 = scmp.eq.s32.totalorder %s24, 0
      %p161 = por %p159, %p160
      %s163 = sadd.s32 %s162, 1
      %p166 = scmp.eq.s32.totalorder %s18, 1
      %p167 = scmp.ne.s32.totalorder %s162, %s164
      %p168 = scmp.eq.s32.totalorder %s18, 0
      %p169 = por %p167, %p168
      %p170 = scmp.ne.s32.totalorder %s162, %s164
      %p171 = scmp.eq.s32.totalorder %s23, 1
      %p172 = por %p170, %p171
      %p173 = scmp.ne.s32.totalorder %s164, %s165
      %p174 = scmp.eq.s32.totalorder %s23, 0
      %p175 = por %p173, %p174
      %p176 = scmp.ne.s32.totalorder %s164, %s165
      %p177 = scmp.eq.s32.totalorder %s24, 1
      %p178 = por %p176, %p177
      %p180 = scmp.ne.s32.totalorder %s165, %s179
      %p181 = scmp.eq.s32.totalorder %s24, 0
      %p182 = por %p180, %p181
      %s183 = ssub.s32 %s18, %s25
      %p184 = scmp.eq.s32.totalorder %s183, 0
      %s186 = sadd.s32 %s185, 1
      %s187 = scalar_select %p184, %s185, %s186
      %p190 = pneg %p184
      %p191 = scmp.eq.s32.totalorder %s18, 1
      %p192 = por %p190, %p191
      %p193 = scmp.ne.s32.totalorder %s185, %s188
      %p194 = scmp.eq.s32.totalorder %s18, 0
      %p195 = por %p193, %p194
      %p196 = scmp.ne.s32.totalorder %s185, %s188
      %p197 = scmp.eq.s32.totalorder %s23, 1
      %p198 = por %p196, %p197
      %p199 = scmp.ne.s32.totalorder %s188, %s189
      %p200 = scmp.eq.s32.totalorder %s23, 0
      %p201 = por %p199, %p200
      %p202 = scmp.ne.s32.totalorder %s188, %s189
      %p203 = scmp.eq.s32.totalorder %s24, 1
      %p204 = por %p202, %p203
      %p206 = scmp.ne.s32.totalorder %s189, %s205
      %p207 = scmp.eq.s32.totalorder %s24, 0
      %p208 = por %p206, %p207
      %p209 = scmp.le.s32.totalorder 1, %s18
      %p210 = scmp.lt.s32.totalorder %s18, 3
      %p211 = pnand %p209, %p210
      %p212 = pneg %p211
      // Predicated region
      $region9: #{tpu_custom_call.1} parent=5 // pred_check
        _
      $region10: #{tpu_custom_call.1} parent=5 // pred_check_branch
        %214 = sbr.rel (%p211) target = $region12
      $region11: #{tpu_custom_call.1} parent=5 // pred_region
        %s215 = ssub.s32 %s18, 1
        // Predicated region
        $region13: #{tpu_custom_call.1} parent=11 // pred_check
          %p216 = pneg %p91
        $region14: #{tpu_custom_call.1} parent=11 // pred_check_branch
          %218 = sbr.rel (%p216) target = $region16
        $region15: #{tpu_custom_call.1} parent=11 // pred_region
          %s220 = ssub.s32 3072, 3072
          %221 = vsyncadd [#allocation4], %s220
          %s222 = sshll.u32 [#allocation3], 4
          %s223 = int_to_ptr.vmem [resolvable:$true] %s222
          %228 = dma.hbm_to_vmem [thread:$0]  %s2, 3072, %s223, [#allocation4], 128, 128, 8
        $region16: #{tpu_custom_call.1} parent=11 // pred_fallthru
          _
        // Predicated region
        $region17: #{tpu_custom_call.1} parent=11 // pred_check
          %p229 = pneg %p112
        $region18: #{tpu_custom_call.1} parent=11 // pred_check_branch
          %231 = sbr.rel (%p229) target = $region20
        $region19: #{tpu_custom_call.1} parent=11 // pred_region
          %s233 = ssub.s32 6144, 6144
          %234 = vsyncadd [#allocation7], %s233
          %s235 = sshll.u32 [#allocation6], 4
          %s236 = int_to_ptr.vmem [resolvable:$true] %s235
          %241 = dma.hbm_to_vmem [thread:$0]  %s3, 6144, %s236, [#allocation7], 128, 128, 8
        $region20: #{tpu_custom_call.1} parent=11 // pred_fallthru
          _
        // Predicated region
        $region21: #{tpu_custom_call.1} parent=11 // pred_check
          %p242 = pneg %p133
        $region22: #{tpu_custom_call.1} parent=11 // pred_check_branch
          %244 = sbr.rel (%p242) target = $region24
        $region23: #{tpu_custom_call.1} parent=11 // pred_region
          _
        $region24: #{tpu_custom_call.1} parent=11 // pred_fallthru
          _
        // Predicated region
        $region25: #{tpu_custom_call.1} parent=11 // pred_check
          %p245 = pneg %p154
        $region26: #{tpu_custom_call.1} parent=11 // pred_check_branch
          %247 = sbr.rel (%p245) target = $region28
        $region27: #{tpu_custom_call.1} parent=11 // pred_region
          _
        $region28: #{tpu_custom_call.1} parent=11 // pred_fallthru
          _
        // Predicated region
        $region29: #{tpu_custom_call.1} parent=11 // pred_check
          %p248 = pneg %p175
        $region30: #{tpu_custom_call.1} parent=11 // pred_check_branch
          %250 = sbr.rel (%p248) target = $region32
        $region31: #{tpu_custom_call.1} parent=11 // pred_region
          _
        $region32: #{tpu_custom_call.1} parent=11 // pred_fallthru
          _
      $region12: #{tpu_custom_call.1} parent=5 // pred_fallthru
        _
      %p251 = scmp.lt.s32.totalorder %s18, 2
      // Predicated region
      $region33: #{tpu_custom_call.1} parent=5 // pred_check
        %p252 = pneg %p251
      $region34: #{tpu_custom_call.1} parent=5 // pred_check_branch
        %254 = sbr.rel (%p252) target = $region36
      $region35: #{tpu_custom_call.1} parent=5 // pred_region
        // Predicated region
        $region37: #{tpu_custom_call.1} parent=35 // pred_check
          %p255 = pneg %p38
        $region38: #{tpu_custom_call.1} parent=35 // pred_check_branch
          %257 = sbr.rel (%p255) target = $region40
        $region39: #{tpu_custom_call.1} parent=35 // pred_region
          %p258 = scmp.lt.s32.totalorder %s18, 1
          %s259 = scalar_select %p258, %s18, 1
          %s260 = smul.addr %s259, 3
          %s261 = smul.addr %s260, 8
          %s262 = scalar_lea.vmem %s0, %s261
        $region40: #{tpu_custom_call.1} parent=35 // pred_fallthru
          _
        // Predicated region
        $region41: #{tpu_custom_call.1} parent=35 // pred_check
          %p263 = pneg %p64
        $region42: #{tpu_custom_call.1} parent=35 // pred_check_branch
          %265 = sbr.rel (%p263) target = $region44
        $region43: #{tpu_custom_call.1} parent=35 // pred_region
          %p266 = scmp.lt.s32.totalorder %s18, 1
          %s267 = scalar_select %p266, %s18, 1
          %s268 = smul.addr %s267, 2
          %s269 = smul.addr %s268, 8
          %s270 = scalar_lea.vmem %s1, %s269
        $region44: #{tpu_custom_call.1} parent=35 // pred_fallthru
          _
      $region36: #{tpu_custom_call.1} parent=5 // pred_fallthru
        _
      %p271 = scmp.le.s32.totalorder 1, %s18
      %p272 = scmp.lt.s32.totalorder %s18, 3
      %p273 = pnand %p271, %p272
      %p274 = pneg %p273
      // Predicated region
      $region45: #{tpu_custom_call.1} parent=5 // pred_check
        _
      $region46: #{tpu_custom_call.1} parent=5 // pred_check_branch
        %276 = sbr.rel (%p273) target = $region48
      $region47: #{tpu_custom_call.1} parent=5 // pred_region
        %s277 = ssub.s32 %s18, 1
        // Predicated region
        $region49: #{tpu_custom_call.1} parent=47 // pred_check
          %p278 = pneg %p91
        $region50: #{tpu_custom_call.1} parent=47 // pred_check_branch
          %280 = sbr.rel (%p278) target = $region52
        $region51: #{tpu_custom_call.1} parent=47 // pred_region
          %281 = dma.done [#allocation4], 3072
        $region52: #{tpu_custom_call.1} parent=47 // pred_fallthru
          _
        // Predicated region
        $region53: #{tpu_custom_call.1} parent=47 // pred_check
          %p282 = pneg %p112
        $region54: #{tpu_custom_call.1} parent=47 // pred_check_branch
          %284 = sbr.rel (%p282) target = $region56
        $region55: #{tpu_custom_call.1} parent=47 // pred_region
          %285 = dma.done [#allocation7], 6144
        $region56: #{tpu_custom_call.1} parent=47 // pred_fallthru
          _
        %p286 = scmp.lt.s32.totalorder %s23, 1
        %s287 = scalar_select %p286, %s23, 1
        %s288 = smul.addr %s287, 3
        %s289 = smul.addr %s288, 8
        %s290 = scalar_lea.vmem %s0, %s289
        %p291 = pneg %p44
        %p292 = pneg %p41
        %p293 = scmp.lt.s32.totalorder %s23, 1
        %s294 = scalar_select %p293, %s23, 1
        %s295 = smul.addr %s294, 2
        %s296 = smul.addr %s295, 8
        %s297 = scalar_lea.vmem %s1, %s296
        %p298 = pneg %p70
        %p299 = pneg %p67
        %p300 = pneg %p91
        %p301 = pneg %p88
        %p302 = pneg %p112
        %p303 = pneg %p109
        %p304 = pneg %p133
        %p305 = pneg %p130
        %p306 = pneg %p154
        %p307 = pneg %p151
        %p308 = pneg %p175
        %p309 = pneg %p172
        %p310 = pneg %p201
        %p311 = pneg %p198
        %s312 = sand.u32 %s188, 1
        %s313 = scalar_lea.sflag [#allocation5], %s312
        %s314 = sand.u32 %s188, 1
        %s315 = smul.addr %s314, 16
        %s316 = scalar_lea.vmem [#allocation8], %s315
        %p317 = scmp.lt.s32.totalorder %s23, 1
        %s318 = scalar_select %p317, %s23, 1
        %s319 = smul.addr %s318, 3
        %s320 = smul.addr %s319, 8
        %s321 = scalar_lea.vmem %s0, %s320
        %p322 = scmp.lt.s32.totalorder %s23, 1
        %s323 = scalar_select %p322, %s23, 1
        %s324 = smul.addr %s323, 2
        %s325 = smul.addr %s324, 8
        %s326 = scalar_lea.vmem %s1, %s325
        %v327 = vld [vmem:[%s321] sm:$0xff]
        %v328 = vld [vmem:[%s321 + $0x8] sm:$0xff]
        %v329 = vld [vmem:[#allocation3] sm:$0xff]
        %v330 = vld [vmem:[#allocation3 + $0x8] sm:$0xff]
        %v331 = vld [vmem:[#allocation3 + $0x10] sm:$0xff]
        %v332 = vld [vmem:[#allocation3 + $0x18] sm:$0xff]
        %v333 = vld [vmem:[#allocation3 + $0x20] sm:$0xff]
        %v334 = vld [vmem:[#allocation3 + $0x28] sm:$0xff]
        %v335 = vld [vmem:[#allocation3 + $0x30] sm:$0xff]
        %v336 = vld [vmem:[#allocation3 + $0x38] sm:$0xff]
        %v337 = vld [vmem:[%s321 + $0x1] sm:$0xff]
        %v338 = vld [vmem:[%s321 + $0x9] sm:$0xff]
        %s339 = scalar_lea.vmem [#allocation3], 64
        %v340 = vld [vmem:[%s339] sm:$0xff]
        %v341 = vld [vmem:[%s339 + $0x8] sm:$0xff]
        %v342 = vld [vmem:[%s339 + $0x10] sm:$0xff]
        %v343 = vld [vmem:[%s339 + $0x18] sm:$0xff]
        %v344 = vld [vmem:[%s339 + $0x20] sm:$0xff]
        %v345 = vld [vmem:[%s339 + $0x28] sm:$0xff]
        %v346 = vld [vmem:[%s339 + $0x30] sm:$0xff]
        %v347 = vld [vmem:[%s339 + $0x38] sm:$0xff]
        %vm348 = vcmask 523264
        %v350 = vsel %vm348, %v337, 0
        %v353 = vsel %vm348, %v338, 0
        %355 = vmatprep.subr.mxu0 0.0
        %356 = vmatpush1.msra.mxu0 %v340
        %357 = vmatprep.subr.mxu0 0.0
        %358 = vmatpush1.msra.mxu0 %v341
        %359 = vmatprep.subr.mxu0 0.0
        %360 = vmatpush1.msra.mxu0 %v342
        %361 = vmatprep.subr.mxu0 0.0
        %362 = vmatpush1.msra.mxu0 %v343
        %363 = vmatprep.subr.mxu0 0.0
        %364 = vmatpush1.msra.mxu0 %v344
        %365 = vmatprep.subr.mxu0 0.0
        %366 = vmatpush1.msra.mxu0 %v345
        %367 = vmatprep.subr.mxu0 0.0
        %368 = vmatpush1.msra.mxu0 %v346
        %369 = vmatprep.subr.mxu0 0.0
        %370 = vmatpush1.msra.mxu0 %v347
        %371 = vmatprep.subr.mxu0 0.0
        %372 = vmatpush1.msra.mxu0 0.0
        %373 = vmatprep.subr.mxu0 0.0
        %374 = vmatpush1.msra.mxu0 0.0
        %375 = vmatprep.subr.mxu0 0.0
        %376 = vmatpush1.msra.mxu0 0.0
        %377 = vmatprep.subr.mxu0 0.0
        %378 = vmatpush1.msra.mxu0 0.0
        %379 = vmatprep.subr.mxu0 0.0
        %380 = vmatpush1.msra.mxu0 0.0
        %381 = vmatprep.subr.mxu0 0.0
        %382 = vmatpush1.msra.mxu0 0.0
        %383 = vmatprep.subr.mxu0 0.0
        %384 = vmatpush1.msra.mxu0 0.0
        %385 = vmatprep.subr.mxu0 0.0
        %386 = vmatpush1.msra.mxu0 0.0
        %387 = vmatprep.subr.mxu0 0.0
        %388 = vmatpush1.msra.mxu0 0.0
        %389 = vmatprep.subr.mxu0 0.0
        %390 = vmatpush1.msra.mxu0 0.0
        %391 = vmatprep.subr.mxu0 0.0
        %392 = vmatpush1.msra.mxu0 0.0
        %393 = vmatprep.subr.mxu0 0.0
        %394 = vmatpush1.msra.mxu0 0.0
        %395 = vmatprep.subr.mxu0 0.0
        %396 = vmatpush1.msra.mxu0 0.0
        %397 = vmatprep.subr.mxu0 0.0
        %398 = vmatpush1.msra.mxu0 0.0
        %399 = vmatprep.subr.mxu0 0.0
        %400 = vmatpush1.msra.mxu0 0.0
        %401 = vmatprep.subr.mxu0 0.0
        %402 = vmatpush1.msra.mxu0 0.0
        %403 = vmatprep.subr.mxu0 0.0
        %404 = vmatpush1.msra.mxu0 0.0
        %405 = vmatprep.subr.mxu0 0.0
        %406 = vmatpush1.msra.mxu0 0.0
        %407 = vmatprep.subr.mxu0 0.0
        %408 = vmatpush1.msra.mxu0 0.0
        %409 = vmatprep.subr.mxu0 0.0
        %410 = vmatpush1.msra.mxu0 0.0
        %411 = vmatprep.subr.mxu0 0.0
        %412 = vmatpush1.msra.mxu0 0.0
        %413 = vmatprep.subr.mxu0 0.0
        %414 = vmatpush1.msra.mxu0 0.0
        %415 = vmatprep.subr.mxu0 0.0
        %416 = vmatpush1.msra.mxu0 0.0
        %417 = vmatprep.subr.mxu0 0.0
        %418 = vmatpush1.msra.mxu0 0.0
        %419 = vmatprep.mubr.f32.mxu0 0.0
        %420 = vmatmul.mubr.f32.gmra.mrb[0].mxu0 %v350
        %v421 = vpop.f32.mrb[0].mxu0
        %v422 = vadd.f32 0.0, %v421
        %v423 = vpop.f32.mrb[0].mxu0
        %424 = vmatprep.mubr.f32.mxu0 0.0
        %425 = vmatmul.mubr.f32.gmra.mrb[0].mxu0 %v353
        %v426 = vpop.f32.mrb[0].mxu0
        %v427 = vadd.f32 0.0, %v426
        %v428 = vpop.f32.mrb[0].mxu0
        %429 = vdwg.mxu0
        %v431 = vsel %vm348, %v327, 0
        %v434 = vsel %vm348, %v328, 0
        %436 = vmatprep.subr.mxu0 0.0
        %437 = vmatpush1.msra.mxu0 %v329
        %438 = vmatprep.subr.mxu0 0.0
        %439 = vmatpush1.msra.mxu0 %v330
        %440 = vmatprep.subr.mxu0 0.0
        %441 = vmatpush1.msra.mxu0 %v331
        %442 = vmatprep.subr.mxu0 0.0
        %443 = vmatpush1.msra.mxu0 %v332
        %444 = vmatprep.subr.mxu0 0.0
        %445 = vmatpush1.msra.mxu0 %v333
        %446 = vmatprep.subr.mxu0 0.0
        %447 = vmatpush1.msra.mxu0 %v334
        %448 = vmatprep.subr.mxu0 0.0
        %449 = vmatpush1.msra.mxu0 %v335
        %450 = vmatprep.subr.mxu0 0.0
        %451 = vmatpush1.msra.mxu0 %v336
        %452 = vmatprep.subr.mxu0 0.0
        %453 = vmatpush1.msra.mxu0 0.0
        %454 = vmatprep.subr.mxu0 0.0
        %455 = vmatpush1.msra.mxu0 0.0
        %456 = vmatprep.subr.mxu0 0.0
        %457 = vmatpush1.msra.mxu0 0.0
        %458 = vmatprep.subr.mxu0 0.0
        %459 = vmatpush1.msra.mxu0 0.0
        %460 = vmatprep.subr.mxu0 0.0
        %461 = vmatpush1.msra.mxu0 0.0
        %462 = vmatprep.subr.mxu0 0.0
        %463 = vmatpush1.msra.mxu0 0.0
        %464 = vmatprep.subr.mxu0 0.0
        %465 = vmatpush1.msra.mxu0 0.0
        %466 = vmatprep.subr.mxu0 0.0
        %467 = vmatpush1.msra.mxu0 0.0
        %468 = vmatprep.subr.mxu0 0.0
        %469 = vmatpush1.msra.mxu0 0.0
        %470 = vmatprep.subr.mxu0 0.0
        %471 = vmatpush1.msra.mxu0 0.0
        %472 = vmatprep.subr.mxu0 0.0
        %473 = vmatpush1.msra.mxu0 0.0
        %474 = vmatprep.subr.mxu0 0.0
        %475 = vmatpush1.msra.mxu0 0.0
        %476 = vmatprep.subr.mxu0 0.0
        %477 = vmatpush1.msra.mxu0 0.0
        %478 = vmatprep.subr.mxu0 0.0
        %479 = vmatpush1.msra.mxu0 0.0
        %480 = vmatprep.subr.mxu0 0.0
        %481 = vmatpush1.msra.mxu0 0.0
        %482 = vmatprep.subr.mxu0 0.0
        %483 = vmatpush1.msra.mxu0 0.0
        %484 = vmatprep.subr.mxu0 0.0
        %485 = vmatpush1.msra.mxu0 0.0
        %486 = vmatprep.subr.mxu0 0.0
        %487 = vmatpush1.msra.mxu0 0.0
        %488 = vmatprep.subr.mxu0 0.0
        %489 = vmatpush1.msra.mxu0 0.0
        %490 = vmatprep.subr.mxu0 0.0
        %491 = vmatpush1.msra.mxu0 0.0
        %492 = vmatprep.subr.mxu0 0.0
        %493 = vmatpush1.msra.mxu0 0.0
        %494 = vmatprep.subr.mxu0 0.0
        %495 = vmatpush1.msra.mxu0 0.0
        %496 = vmatprep.subr.mxu0 0.0
        %497 = vmatpush1.msra.mxu0 0.0
        %498 = vmatprep.subr.mxu0 0.0
        %499 = vmatpush1.msra.mxu0 0.0
        %500 = vmatprep.mubr.f32.mxu0 0.0
        %501 = vmatmul.mubr.f32.gmra.mrb[0].mxu0 %v431
        %v502 = vpop.f32.mrb[0].mxu0
        %v503 = vadd.f32 %v422, %v502
        %v504 = vpop.f32.mrb[0].mxu0
        %505 = vmatprep.mubr.f32.mxu0 0.0
        %506 = vmatmul.mubr.f32.gmra.mrb[0].mxu0 %v434
        %v507 = vpop.f32.mrb[0].mxu0
        %v508 = vadd.f32 %v427, %v507
        %v509 = vpop.f32.mrb[0].mxu0
        %510 = vdwg.mxu0
        %v511 = vld [vmem:[%s321 + $0x2] sm:$0xff]
        %v512 = vld [vmem:[%s321 + $0xa] sm:$0xff]
        %s513 = scalar_lea.vmem [#allocation3], 128
        %v514 = vld [vmem:[%s513] sm:$0xff]
        %v515 = vld [vmem:[%s513 + $0x8] sm:$0xff]
        %v516 = vld [vmem:[%s513 + $0x10] sm:$0xff]
        %v517 = vld [vmem:[%s513 + $0x18] sm:$0xff]
        %v518 = vld [vmem:[%s513 + $0x20] sm:$0xff]
        %v519 = vld [vmem:[%s513 + $0x28] sm:$0xff]
        %v520 = vld [vmem:[%s513 + $0x30] sm:$0xff]
        %v521 = vld [vmem:[%s513 + $0x38] sm:$0xff]
        %v523 = vsel %vm348, %v511, 0
        %v526 = vsel %vm348, %v512, 0
        %528 = vmatprep.subr.mxu0 0.0
        %529 = vmatpush1.msra.mxu0 %v514
        %530 = vmatprep.subr.mxu0 0.0
        %531 = vmatpush1.msra.mxu0 %v515
        %532 = vmatprep.subr.mxu0 0.0
        %533 = vmatpush1.msra.mxu0 %v516
        %534 = vmatprep.subr.mxu0 0.0
        %535 = vmatpush1.msra.mxu0 %v517
        %536 = vmatprep.subr.mxu0 0.0
        %537 = vmatpush1.msra.mxu0 %v518
        %538 = vmatprep.subr.mxu0 0.0
        %539 = vmatpush1.msra.mxu0 %v519
        %540 = vmatprep.subr.mxu0 0.0
        %541 = vmatpush1.msra.mxu0 %v520
        %542 = vmatprep.subr.mxu0 0.0
        %543 = vmatpush1.msra.mxu0 %v521
        %544 = vmatprep.subr.mxu0 0.0
        %545 = vmatpush1.msra.mxu0 0.0
        %546 = vmatprep.subr.mxu0 0.0
        %547 = vmatpush1.msra.mxu0 0.0
        %548 = vmatprep.subr.mxu0 0.0
        %549 = vmatpush1.msra.mxu0 0.0
        %550 = vmatprep.subr.mxu0 0.0
        %551 = vmatpush1.msra.mxu0 0.0
        %552 = vmatprep.subr.mxu0 0.0
        %553 = vmatpush1.msra.mxu0 0.0
        %554 = vmatprep.subr.mxu0 0.0
        %555 = vmatpush1.msra.mxu0 0.0
        %556 = vmatprep.subr.mxu0 0.0
        %557 = vmatpush1.msra.mxu0 0.0
        %558 = vmatprep.subr.mxu0 0.0
        %559 = vmatpush1.msra.mxu0 0.0
        %560 = vmatprep.subr.mxu0 0.0
        %561 = vmatpush1.msra.mxu0 0.0
        %562 = vmatprep.subr.mxu0 0.0
        %563 = vmatpush1.msra.mxu0 0.0
        %564 = vmatprep.subr.mxu0 0.0
        %565 = vmatpush1.msra.mxu0 0.0
        %566 = vmatprep.subr.mxu0 0.0
        %567 = vmatpush1.msra.mxu0 0.0
        %568 = vmatprep.subr.mxu0 0.0
        %569 = vmatpush1.msra.mxu0 0.0
        %570 = vmatprep.subr.mxu0 0.0
        %571 = vmatpush1.msra.mxu0 0.0
        %572 = vmatprep.subr.mxu0 0.0
        %573 = vmatpush1.msra.mxu0 0.0
        %574 = vmatprep.subr.mxu0 0.0
        %575 = vmatpush1.msra.mxu0 0.0
        %576 = vmatprep.subr.mxu0 0.0
        %577 = vmatpush1.msra.mxu0 0.0
        %578 = vmatprep.subr.mxu0 0.0
        %579 = vmatpush1.msra.mxu0 0.0
        %580 = vmatprep.subr.mxu0 0.0
        %581 = vmatpush1.msra.mxu0 0.0
        %582 = vmatprep.subr.mxu0 0.0
        %583 = vmatpush1.msra.mxu0 0.0
        %584 = vmatprep.subr.mxu0 0.0
        %585 = vmatpush1.msra.mxu0 0.0
        %586 = vmatprep.subr.mxu0 0.0
        %587 = vmatpush1.msra.mxu0 0.0
        %588 = vmatprep.subr.mxu0 0.0
        %589 = vmatpush1.msra.mxu0 0.0
        %590 = vmatprep.subr.mxu0 0.0
        %591 = vmatpush1.msra.mxu0 0.0
        %592 = vmatprep.mubr.f32.mxu0 0.0
        %593 = vmatmul.mubr.f32.gmra.mrb[0].mxu0 %v523
        %v594 = vpop.f32.mrb[0].mxu0
        %v595 = vadd.f32 0.0, %v594
        %v596 = vpop.f32.mrb[0].mxu0
        %597 = vmatprep.mubr.f32.mxu0 0.0
        %598 = vmatmul.mubr.f32.gmra.mrb[0].mxu0 %v526
        %v599 = vpop.f32.mrb[0].mxu0
        %v600 = vadd.f32 0.0, %v599
        %v601 = vpop.f32.mrb[0].mxu0
        %602 = vdwg.mxu0
        %v603 = vadd.f32 %v503, %v595
        %v604 = vadd.f32 %v508, %v600
        %v605 = vld [vmem:[%s5] sm:$0x1]
        %v607 = vlaneseq
        %v608 = vshrl.u32 %v607, 7
        %v609 = vsub.s32 0, %v608
        %v610 = vrot.slane %v605, %v609
        %v612 = vadd.f32 %v603, %v610
        %v613 = vadd.f32 %v604, %v610
        %v614 = vmax.f32 %v612, 0.0
        %v615 = vmax.f32 %v613, 0.0
        %616 = vst [vmem:[#allocation2] sm:$0x1] 0.0
        %617 = vst [vmem:[#allocation2 + $0x11] sm:$0x1] 0.0
        %618 = vst [vmem:[#allocation2 + $0x1] sm:$0xff] %v614
        %619 = vst [vmem:[#allocation2 + $0x9] sm:$0xff] %v615
        %v620 = vld [vmem:[%s326] sm:$0xff]
        %v621 = vld [vmem:[%s326 + $0x8] sm:$0xff]
        %v622 = vld [vmem:[%s4] sm:$0xff]
        %v623 = vld [vmem:[%s4 + $0x8] sm:$0xff]
        %v624 = vld [vmem:[%s4 + $0x10] sm:$0xff]
        %v625 = vld [vmem:[%s4 + $0x18] sm:$0xff]
        %v626 = vld [vmem:[%s4 + $0x20] sm:$0xff]
        %v627 = vld [vmem:[%s4 + $0x28] sm:$0xff]
        %v628 = vld [vmem:[%s4 + $0x30] sm:$0xff]
        %v629 = vld [vmem:[%s4 + $0x38] sm:$0xff]
        %v630 = vld [vmem:[#allocation2] sm:$0xff]
        %v631 = vld [vmem:[#allocation2 + $0x8] sm:$0xff]
        %v632 = vld [vmem:[#allocation6] sm:$0xff]
        %v633 = vld [vmem:[#allocation6 + $0x8] sm:$0xff]
        %v634 = vld [vmem:[#allocation6 + $0x10] sm:$0xff]
        %v635 = vld [vmem:[#allocation6 + $0x18] sm:$0xff]
        %v636 = vld [vmem:[#allocation6 + $0x20] sm:$0xff]
        %v637 = vld [vmem:[#allocation6 + $0x28] sm:$0xff]
        %v638 = vld [vmem:[#allocation6 + $0x30] sm:$0xff]
        %v639 = vld [vmem:[#allocation6 + $0x38] sm:$0xff]
        %v640 = vld [vmem:[#allocation6 + $0x40] sm:$0xff]
        %v641 = vld [vmem:[#allocation6 + $0x48] sm:$0xff]
        %v642 = vld [vmem:[#allocation6 + $0x50] sm:$0xff]
        %v643 = vld [vmem:[#allocation6 + $0x58] sm:$0xff]
        %v644 = vld [vmem:[#allocation6 + $0x60] sm:$0xff]
        %v645 = vld [vmem:[#allocation6 + $0x68] sm:$0xff]
        %v646 = vld [vmem:[#allocation6 + $0x70] sm:$0xff]
        %v647 = vld [vmem:[#allocation6 + $0x78] sm:$0xff]
        %648 = vmatprep.subr.mxu0 0.0
        %649 = vmatpush1.msra.mxu0 %v632
        %650 = vmatprep.subr.mxu0 0.0
        %651 = vmatpush1.msra.mxu0 %v633
        %652 = vmatprep.subr.mxu0 0.0
        %653 = vmatpush1.msra.mxu0 %v634
        %654 = vmatprep.subr.mxu0 0.0
        %655 = vmatpush1.msra.mxu0 %v635
        %656 = vmatprep.subr.mxu0 0.0
        %657 = vmatpush1.msra.mxu0 %v636
        %658 = vmatprep.subr.mxu0 0.0
        %659 = vmatpush1.msra.mxu0 %v637
        %660 = vmatprep.subr.mxu0 0.0
        %661 = vmatpush1.msra.mxu0 %v638
        %662 = vmatprep.subr.mxu0 0.0
        %663 = vmatpush1.msra.mxu0 %v639
        %664 = vmatprep.subr.mxu0 0.0
        %665 = vmatpush1.msra.mxu0 %v640
        %666 = vmatprep.subr.mxu0 0.0
        %667 = vmatpush1.msra.mxu0 %v641
        %668 = vmatprep.subr.mxu0 0.0
        %669 = vmatpush1.msra.mxu0 %v642
        %670 = vmatprep.subr.mxu0 0.0
        %671 = vmatpush1.msra.mxu0 %v643
        %672 = vmatprep.subr.mxu0 0.0
        %673 = vmatpush1.msra.mxu0 %v644
        %674 = vmatprep.subr.mxu0 0.0
        %675 = vmatpush1.msra.mxu0 %v645
        %676 = vmatprep.subr.mxu0 0.0
        %677 = vmatpush1.msra.mxu0 %v646
        %678 = vmatprep.subr.mxu0 0.0
        %679 = vmatpush1.msra.mxu0 %v647
        %680 = vmatprep.subr.mxu0 0.0
        %681 = vmatpush1.msra.mxu0 0.0
        %682 = vmatprep.subr.mxu0 0.0
        %683 = vmatpush1.msra.mxu0 0.0
        %684 = vmatprep.subr.mxu0 0.0
        %685 = vmatpush1.msra.mxu0 0.0
        %686 = vmatprep.subr.mxu0 0.0
        %687 = vmatpush1.msra.mxu0 0.0
        %688 = vmatprep.subr.mxu0 0.0
        %689 = vmatpush1.msra.mxu0 0.0
        %690 = vmatprep.subr.mxu0 0.0
        %691 = vmatpush1.msra.mxu0 0.0
        %692 = vmatprep.subr.mxu0 0.0
        %693 = vmatpush1.msra.mxu0 0.0
        %694 = vmatprep.subr.mxu0 0.0
        %695 = vmatpush1.msra.mxu0 0.0
        %696 = vmatprep.subr.mxu0 0.0
        %697 = vmatpush1.msra.mxu0 0.0
        %698 = vmatprep.subr.mxu0 0.0
        %699 = vmatpush1.msra.mxu0 0.0
        %700 = vmatprep.subr.mxu0 0.0
        %701 = vmatpush1.msra.mxu0 0.0
        %702 = vmatprep.subr.mxu0 0.0
        %703 = vmatpush1.msra.mxu0 0.0
        %704 = vmatprep.subr.mxu0 0.0
        %705 = vmatpush1.msra.mxu0 0.0
        %706 = vmatprep.subr.mxu0 0.0
        %707 = vmatpush1.msra.mxu0 0.0
        %708 = vmatprep.subr.mxu0 0.0
        %709 = vmatpush1.msra.mxu0 0.0
        %710 = vmatprep.subr.mxu0 0.0
        %711 = vmatpush1.msra.mxu0 0.0
        %712 = vmatprep.mubr.f32.mxu0 0.0
        %713 = vmatmul.mubr.f32.gmra.mrb[0].mxu0 %v630
        %v714 = vpop.f32.mrb[0].mxu0
        %v715 = vadd.f32 0.0, %v714
        %v716 = vpop.f32.mrb[0].mxu0
        %717 = vmatprep.mubr.f32.mxu0 0.0
        %718 = vmatmul.mubr.f32.gmra.mrb[0].mxu0 %v631
        %v719 = vpop.f32.mrb[0].mxu0
        %v720 = vadd.f32 0.0, %v719
        %v721 = vpop.f32.mrb[0].mxu0
        %722 = vdwg.mxu0
        %v724 = vsel %vm348, %v620, 0
        %v727 = vsel %vm348, %v621, 0
        %729 = vmatprep.subr.mxu0 0.0
        %730 = vmatpush1.msra.mxu0 %v622
        %731 = vmatprep.subr.mxu0 0.0
        %732 = vmatpush1.msra.mxu0 %v623
        %733 = vmatprep.subr.mxu0 0.0
        %734 = vmatpush1.msra.mxu0 %v624
        %735 = vmatprep.subr.mxu0 0.0
        %736 = vmatpush1.msra.mxu0 %v625
        %737 = vmatprep.subr.mxu0 0.0
        %738 = vmatpush1.msra.mxu0 %v626
        %739 = vmatprep.subr.mxu0 0.0
        %740 = vmatpush1.msra.mxu0 %v627
        %741 = vmatprep.subr.mxu0 0.0
        %742 = vmatpush1.msra.mxu0 %v628
        %743 = vmatprep.subr.mxu0 0.0
        %744 = vmatpush1.msra.mxu0 %v629
        %745 = vmatprep.subr.mxu0 0.0
        %746 = vmatpush1.msra.mxu0 0.0
        %747 = vmatprep.subr.mxu0 0.0
        %748 = vmatpush1.msra.mxu0 0.0
        %749 = vmatprep.subr.mxu0 0.0
        %750 = vmatpush1.msra.mxu0 0.0
        %751 = vmatprep.subr.mxu0 0.0
        %752 = vmatpush1.msra.mxu0 0.0
        %753 = vmatprep.subr.mxu0 0.0
        %754 = vmatpush1.msra.mxu0 0.0
        %755 = vmatprep.subr.mxu0 0.0
        %756 = vmatpush1.msra.mxu0 0.0
        %757 = vmatprep.subr.mxu0 0.0
        %758 = vmatpush1.msra.mxu0 0.0
        %759 = vmatprep.subr.mxu0 0.0
        %760 = vmatpush1.msra.mxu0 0.0
        %761 = vmatprep.subr.mxu0 0.0
        %762 = vmatpush1.msra.mxu0 0.0
        %763 = vmatprep.subr.mxu0 0.0
        %764 = vmatpush1.msra.mxu0 0.0
        %765 = vmatprep.subr.mxu0 0.0
        %766 = vmatpush1.msra.mxu0 0.0
        %767 = vmatprep.subr.mxu0 0.0
        %768 = vmatpush1.msra.mxu0 0.0
        %769 = vmatprep.subr.mxu0 0.0
        %770 = vmatpush1.msra.mxu0 0.0
        %771 = vmatprep.subr.mxu0 0.0
        %772 = vmatpush1.msra.mxu0 0.0
        %773 = vmatprep.subr.mxu0 0.0
        %774 = vmatpush1.msra.mxu0 0.0
        %775 = vmatprep.subr.mxu0 0.0
        %776 = vmatpush1.msra.mxu0 0.0
        %777 = vmatprep.subr.mxu0 0.0
        %778 = vmatpush1.msra.mxu0 0.0
        %779 = vmatprep.subr.mxu0 0.0
        %780 = vmatpush1.msra.mxu0 0.0
        %781 = vmatprep.subr.mxu0 0.0
        %782 = vmatpush1.msra.mxu0 0.0
        %783 = vmatprep.subr.mxu0 0.0
        %784 = vmatpush1.msra.mxu0 0.0
        %785 = vmatprep.subr.mxu0 0.0
        %786 = vmatpush1.msra.mxu0 0.0
        %787 = vmatprep.subr.mxu0 0.0
        %788 = vmatpush1.msra.mxu0 0.0
        %789 = vmatprep.subr.mxu0 0.0
        %790 = vmatpush1.msra.mxu0 0.0
        %791 = vmatprep.subr.mxu0 0.0
        %792 = vmatpush1.msra.mxu0 0.0
        %793 = vmatprep.mubr.f32.mxu0 0.0
        %794 = vmatmul.mubr.f32.gmra.mrb[0].mxu0 %v724
        %v795 = vpop.f32.mrb[0].mxu0
        %v796 = vadd.f32 %v715, %v795
        %v797 = vpop.f32.mrb[0].mxu0
        %798 = vmatprep.mubr.f32.mxu0 0.0
        %799 = vmatmul.mubr.f32.gmra.mrb[0].mxu0 %v727
        %v800 = vpop.f32.mrb[0].mxu0
        %v801 = vadd.f32 %v720, %v800
        %v802 = vpop.f32.mrb[0].mxu0
        %803 = vdwg.mxu0
        %v804 = vld [vmem:[#allocation2 + $0x1] sm:$0xff]
        %v805 = vld [vmem:[#allocation2 + $0x9] sm:$0xff]
        %s806 = scalar_lea.vmem [#allocation6], 128
        %v807 = vld [vmem:[%s806] sm:$0xff]
        %v808 = vld [vmem:[%s806 + $0x8] sm:$0xff]
        %v809 = vld [vmem:[%s806 + $0x10] sm:$0xff]
        %v810 = vld [vmem:[%s806 + $0x18] sm:$0xff]
        %v811 = vld [vmem:[%s806 + $0x20] sm:$0xff]
        %v812 = vld [vmem:[%s806 + $0x28] sm:$0xff]
        %v813 = vld [vmem:[%s806 + $0x30] sm:$0xff]
        %v814 = vld [vmem:[%s806 + $0x38] sm:$0xff]
        %v815 = vld [vmem:[%s806 + $0x40] sm:$0xff]
        %v816 = vld [vmem:[%s806 + $0x48] sm:$0xff]
        %v817 = vld [vmem:[%s806 + $0x50] sm:$0xff]
        %v818 = vld [vmem:[%s806 + $0x58] sm:$0xff]
        %v819 = vld [vmem:[%s806 + $0x60] sm:$0xff]
        %v820 = vld [vmem:[%s806 + $0x68] sm:$0xff]
        %v821 = vld [vmem:[%s806 + $0x70] sm:$0xff]
        %v822 = vld [vmem:[%s806 + $0x78] sm:$0xff]
        %823 = vmatprep.subr.mxu0 0.0
        %824 = vmatpush1.msra.mxu0 %v807
        %825 = vmatprep.subr.mxu0 0.0
        %826 = vmatpush1.msra.mxu0 %v808
        %827 = vmatprep.subr.mxu0 0.0
        %828 = vmatpush1.msra.mxu0 %v809
        %829 = vmatprep.subr.mxu0 0.0
        %830 = vmatpush1.msra.mxu0 %v810
        %831 = vmatprep.subr.mxu0 0.0
        %832 = vmatpush1.msra.mxu0 %v811
        %833 = vmatprep.subr.mxu0 0.0
        %834 = vmatpush1.msra.mxu0 %v812
        %835 = vmatprep.subr.mxu0 0.0
        %836 = vmatpush1.msra.mxu0 %v813
        %837 = vmatprep.subr.mxu0 0.0
        %838 = vmatpush1.msra.mxu0 %v814
        %839 = vmatprep.subr.mxu0 0.0
        %840 = vmatpush1.msra.mxu0 %v815
        %841 = vmatprep.subr.mxu0 0.0
        %842 = vmatpush1.msra.mxu0 %v816
        %843 = vmatprep.subr.mxu0 0.0
        %844 = vmatpush1.msra.mxu0 %v817
        %845 = vmatprep.subr.mxu0 0.0
        %846 = vmatpush1.msra.mxu0 %v818
        %847 = vmatprep.subr.mxu0 0.0
        %848 = vmatpush1.msra.mxu0 %v819
        %849 = vmatprep.subr.mxu0 0.0
        %850 = vmatpush1.msra.mxu0 %v820
        %851 = vmatprep.subr.mxu0 0.0
        %852 = vmatpush1.msra.mxu0 %v821
        %853 = vmatprep.subr.mxu0 0.0
        %854 = vmatpush1.msra.mxu0 %v822
        %855 = vmatprep.subr.mxu0 0.0
        %856 = vmatpush1.msra.mxu0 0.0
        %857 = vmatprep.subr.mxu0 0.0
        %858 = vmatpush1.msra.mxu0 0.0
        %859 = vmatprep.subr.mxu0 0.0
        %860 = vmatpush1.msra.mxu0 0.0
        %861 = vmatprep.subr.mxu0 0.0
        %862 = vmatpush1.msra.mxu0 0.0
        %863 = vmatprep.subr.mxu0 0.0
        %864 = vmatpush1.msra.mxu0 0.0
        %865 = vmatprep.subr.mxu0 0.0
        %866 = vmatpush1.msra.mxu0 0.0
        %867 = vmatprep.subr.mxu0 0.0
        %868 = vmatpush1.msra.mxu0 0.0
        %869 = vmatprep.subr.mxu0 0.0
        %870 = vmatpush1.msra.mxu0 0.0
        %871 = vmatprep.subr.mxu0 0.0
        %872 = vmatpush1.msra.mxu0 0.0
        %873 = vmatprep.subr.mxu0 0.0
        %874 = vmatpush1.msra.mxu0 0.0
        %875 = vmatprep.subr.mxu0 0.0
        %876 = vmatpush1.msra.mxu0 0.0
        %877 = vmatprep.subr.mxu0 0.0
        %878 = vmatpush1.msra.mxu0 0.0
        %879 = vmatprep.subr.mxu0 0.0
        %880 = vmatpush1.msra.mxu0 0.0
        %881 = vmatprep.subr.mxu0 0.0
        %882 = vmatpush1.msra.mxu0 0.0
        %883 = vmatprep.subr.mxu0 0.0
        %884 = vmatpush1.msra.mxu0 0.0
        %885 = vmatprep.subr.mxu0 0.0
        %886 = vmatpush1.msra.mxu0 0.0
        %887 = vmatprep.mubr.f32.mxu0 0.0
        %888 = vmatmul.mubr.f32.gmra.mrb[0].mxu0 %v804
        %v889 = vpop.f32.mrb[0].mxu0
        %v890 = vadd.f32 0.0, %v889
        %v891 = vpop.f32.mrb[0].mxu0
        %892 = vmatprep.mubr.f32.mxu0 0.0
        %893 = vmatmul.mubr.f32.gmra.mrb[0].mxu0 %v805
        %v894 = vpop.f32.mrb[0].mxu0
        %v895 = vadd.f32 0.0, %v894
        %v896 = vpop.f32.mrb[0].mxu0
        %897 = vdwg.mxu0
        %v898 = vadd.f32 %v796, %v890
        %v899 = vadd.f32 %v801, %v895
        %v900 = vld [vmem:[#allocation2 + $0x2] sm:$0xff]
        %v901 = vld [vmem:[#allocation2 + $0xa] sm:$0xff]
        %s902 = scalar_lea.vmem [#allocation6], 256
        %v903 = vld [vmem:[%s902] sm:$0xff]
        %v904 = vld [vmem:[%s902 + $0x8] sm:$0xff]
        %v905 = vld [vmem:[%s902 + $0x10] sm:$0xff]
        %v906 = vld [vmem:[%s902 + $0x18] sm:$0xff]
        %v907 = vld [vmem:[%s902 + $0x20] sm:$0xff]
        %v908 = vld [vmem:[%s902 + $0x28] sm:$0xff]
        %v909 = vld [vmem:[%s902 + $0x30] sm:$0xff]
        %v910 = vld [vmem:[%s902 + $0x38] sm:$0xff]
        %v911 = vld [vmem:[%s902 + $0x40] sm:$0xff]
        %v912 = vld [vmem:[%s902 + $0x48] sm:$0xff]
        %v913 = vld [vmem:[%s902 + $0x50] sm:$0xff]
        %v914 = vld [vmem:[%s902 + $0x58] sm:$0xff]
        %v915 = vld [vmem:[%s902 + $0x60] sm:$0xff]
        %v916 = vld [vmem:[%s902 + $0x68] sm:$0xff]
        %v917 = vld [vmem:[%s902 + $0x70] sm:$0xff]
        %v918 = vld [vmem:[%s902 + $0x78] sm:$0xff]
        %919 = vmatprep.subr.mxu0 0.0
        %920 = vmatpush1.msra.mxu0 %v903
        %921 = vmatprep.subr.mxu0 0.0
        %922 = vmatpush1.msra.mxu0 %v904
        %923 = vmatprep.subr.mxu0 0.0
        %924 = vmatpush1.msra.mxu0 %v905
        %925 = vmatprep.subr.mxu0 0.0
        %926 = vmatpush1.msra.mxu0 %v906
        %927 = vmatprep.subr.mxu0 0.0
        %928 = vmatpush1.msra.mxu0 %v907
        %929 = vmatprep.subr.mxu0 0.0
        %930 = vmatpush1.msra.mxu0 %v908
        %931 = vmatprep.subr.mxu0 0.0
        %932 = vmatpush1.msra.mxu0 %v909
        %933 = vmatprep.subr.mxu0 0.0
        %934 = vmatpush1.msra.mxu0 %v910
        %935 = vmatprep.subr.mxu0 0.0
        %936 = vmatpush1.msra.mxu0 %v911
        %937 = vmatprep.subr.mxu0 0.0
        %938 = vmatpush1.msra.mxu0 %v912
        %939 = vmatprep.subr.mxu0 0.0
        %940 = vmatpush1.msra.mxu0 %v913
        %941 = vmatprep.subr.mxu0 0.0
        %942 = vmatpush1.msra.mxu0 %v914
        %943 = vmatprep.subr.mxu0 0.0
        %944 = vmatpush1.msra.mxu0 %v915
        %945 = vmatprep.subr.mxu0 0.0
        %946 = vmatpush1.msra.mxu0 %v916
        %947 = vmatprep.subr.mxu0 0.0
        %948 = vmatpush1.msra.mxu0 %v917
        %949 = vmatprep.subr.mxu0 0.0
        %950 = vmatpush1.msra.mxu0 %v918
        %951 = vmatprep.subr.mxu0 0.0
        %952 = vmatpush1.msra.mxu0 0.0
        %953 = vmatprep.subr.mxu0 0.0
        %954 = vmatpush1.msra.mxu0 0.0
        %955 = vmatprep.subr.mxu0 0.0
        %956 = vmatpush1.msra.mxu0 0.0
        %957 = vmatprep.subr.mxu0 0.0
        %958 = vmatpush1.msra.mxu0 0.0
        %959 = vmatprep.subr.mxu0 0.0
        %960 = vmatpush1.msra.mxu0 0.0
        %961 = vmatprep.subr.mxu0 0.0
        %962 = vmatpush1.msra.mxu0 0.0
        %963 = vmatprep.subr.mxu0 0.0
        %964 = vmatpush1.msra.mxu0 0.0
        %965 = vmatprep.subr.mxu0 0.0
        %966 = vmatpush1.msra.mxu0 0.0
        %967 = vmatprep.subr.mxu0 0.0
        %968 = vmatpush1.msra.mxu0 0.0
        %969 = vmatprep.subr.mxu0 0.0
        %970 = vmatpush1.msra.mxu0 0.0
        %971 = vmatprep.subr.mxu0 0.0
        %972 = vmatpush1.msra.mxu0 0.0
        %973 = vmatprep.subr.mxu0 0.0
        %974 = vmatpush1.msra.mxu0 0.0
        %975 = vmatprep.subr.mxu0 0.0
        %976 = vmatpush1.msra.mxu0 0.0
        %977 = vmatprep.subr.mxu0 0.0
        %978 = vmatpush1.msra.mxu0 0.0
        %979 = vmatprep.subr.mxu0 0.0
        %980 = vmatpush1.msra.mxu0 0.0
        %981 = vmatprep.subr.mxu0 0.0
        %982 = vmatpush1.msra.mxu0 0.0
        %983 = vmatprep.mubr.f32.mxu0 0.0
        %984 = vmatmul.mubr.f32.gmra.mrb[0].mxu0 %v900
        %v985 = vpop.f32.mrb[0].mxu0
        %v986 = vadd.f32 0.0, %v985
        %v987 = vpop.f32.mrb[0].mxu0
        %988 = vmatprep.mubr.f32.mxu0 0.0
        %989 = vmatmul.mubr.f32.gmra.mrb[0].mxu0 %v901
        %v990 = vpop.f32.mrb[0].mxu0
        %v991 = vadd.f32 0.0, %v990
        %v992 = vpop.f32.mrb[0].mxu0
        %993 = vdwg.mxu0
        %v994 = vadd.f32 %v898, %v986
        %v995 = vadd.f32 %v899, %v991
        %v996 = vld [vmem:[%s6] sm:$0x1]
        %v998 = vlaneseq
        %v999 = vshrl.u32 %v998, 7
        %v1000 = vsub.s32 0, %v999
        %v1001 = vrot.slane %v996, %v1000
        %v1003 = vadd.f32 %v994, %v1001
        %v1004 = vadd.f32 %v995, %v1001
        %v1005 = vmax.f32 %v1003, 0.0
        %v1006 = vmax.f32 %v1004, 0.0
        %1007 = vst [vmem:[%s316] sm:$0xff] %v1005
        %1008 = vst [vmem:[%s316 + $0x8] sm:$0xff] %v1006
        %s1009 = sand.u32 %s188, 1
        %s1010 = scalar_lea.sflag [#allocation5], %s1009
        %s1011 = sand.u32 %s188, 1
        %s1012 = smul.addr %s1011, 16
        %s1013 = scalar_lea.vmem [#allocation8], %s1012
        // Predicated region
        $region57: #{tpu_custom_call.1} parent=47 // pred_check
          %p1014 = pneg %p198
        $region58: #{tpu_custom_call.1} parent=47 // pred_check_branch
          %1016 = sbr.rel (%p1014) target = $region60
        $region59: #{tpu_custom_call.1} parent=47 // pred_region
          %s1018 = ssub.s32 256, 256
          %1019 = vsyncadd %s1010, %s1018
          %s1020 = smul.addr %s23, 2
          %s1021 = smul.addr %s1020, 128
          %s1022 = scalar_lea.hbm %s7, %s1021
          %s1023 = sshll.u32 %s1013, 4
          %s1024 = int_to_ptr.vmem [resolvable:$true] %s1023
          %1029 = dma.vmem_to_hbm [thread:$0]  %s1024, 256, %s1022, %s1010, 128, 128, 8
        $region60: #{tpu_custom_call.1} parent=47 // pred_fallthru
          _
      $region48: #{tpu_custom_call.1} parent=5 // pred_fallthru
        _
      %p1030 = scmp.le.s32.totalorder 2, %s18
      // Predicated region
      $region61: #{tpu_custom_call.1} parent=5 // pred_check
        %p1031 = pneg %p1030
      $region62: #{tpu_custom_call.1} parent=5 // pred_check_branch
        %1033 = sbr.rel (%p1031) target = $region64
      $region63: #{tpu_custom_call.1} parent=5 // pred_region
        %s1034 = ssub.s32 %s18, 2
        // Predicated region
        $region65: #{tpu_custom_call.1} parent=63 // pred_check
          %p1035 = pneg %p204
        $region66: #{tpu_custom_call.1} parent=63 // pred_check_branch
          %1037 = sbr.rel (%p1035) target = $region68
        $region67: #{tpu_custom_call.1} parent=63 // pred_region
          %s1038 = sand.u32 %s189, 1
          %s1039 = scalar_lea.sflag [#allocation5], %s1038
          %s1040 = sand.u32 %s189, 1
          %s1041 = smul.addr %s1040, 16
          %s1042 = scalar_lea.vmem [#allocation8], %s1041
          %1043 = dma.done %s1039, 256
        $region68: #{tpu_custom_call.1} parent=63 // pred_fallthru
          _
      $region64: #{tpu_custom_call.1} parent=5 // pred_fallthru
        _
    $region6: #{tpu_custom_call.1} parent=1 // loop_footer
      %s22 = sadd.s32 1, %s18
    $region7: #{tpu_custom_call.1} parent=1 // loop_footer_branch
      %17 = sbr.rel target = $region3
    $region8: #{tpu_custom_call.1} parent=1 // loop_exit
      _
    %1044 = vsyncpa [#allocation4], 1
    %s1045 = scalar_lea.sflag [#allocation4], 1
    %1046 = vsyncpa %s1045, 1
    %1047 = vsyncpa [#allocation7], 1
    %1048 = vsyncpa [#allocation5], 1
    %s1049 = scalar_lea.sflag [#allocation5], 1
    %1050 = vsyncpa %s1049, 1

</llo_original>
